<compile_context>
chip_gen: v7x
topology: tpu7x:2x2x1
jax: 0.10.0
libtpu: 0.0.40
codegen_flags: <defaults>
</compile_context>

<pallas_src>
import jax
import jax.numpy as jnp
from jax.experimental import pallas as pl
from jax.experimental.pallas import tpu as pltpu


_TARGET_TILE_BYTES = 4 * 1024 * 1024   # ~4 MiB per input tile
_MAX_LANE_W = 4096                      # widest lane-dense last dim we use
_FALLBACK_LANE_W = 1024                 # ragged-size pad width (wide-lane)
_SPLIT_BYTES = 2 * 1024 * 1024          # above this, force grid >= 2 (2 TCs)


def _poly3_kernel(coef_ref, x_ref, o_ref):
    # coef_ref: SMEM (4,) f32 scalar-prefetch -> [a, b, c, d]
    # x_ref/o_ref: VMEM (block_rows, lane_w) tiles in the original dtype
    a = coef_ref[0]
    b = coef_ref[1]
    c = coef_ref[2]
    d = coef_ref[3]
    x = x_ref[...].astype(jnp.float32)
    # Horner form: 3 mul + 3 add, no live x^2 temporary
    y = d + x * (a + x * (b + x * c))
    o_ref[...] = y.astype(o_ref.dtype)


def _pick_lane_width(n):
    """Largest multiple of 128 that divides n, capped at _MAX_LANE_W."""
    for k in range(_MAX_LANE_W // 128, 0, -1):
        w = k * 128
        if n % w == 0:
            return w
    return None


def polynomial3(x, a, b, c, d):
    """Elementwise a*x + b*x**2 + c*x**3 + d via a Pallas TPU kernel."""
    orig_shape = x.shape

    # Match torch's float promotion if a non-float input ever shows up.
    if not jnp.issubdtype(x.dtype, jnp.floating):
        x = x.astype(jnp.float32)
    orig_dtype = x.dtype
    itemsize = jnp.dtype(orig_dtype).itemsize
    # Native sublane packing: 8 rows for 4-byte, 16 for 2-byte, 32 for 1-byte.
    sublane = {4: 8, 2: 16, 1: 32}.get(itemsize, 8)

    n = x.size
    flat = x.reshape(-1)  # pure reshape: no HBM copy

    lane_w = _pick_lane_width(n)
    padded = False
    if lane_w is None:
        # Ragged size: minimal wide-lane fallback padding (one extra HBM pass).
        lane_w = _FALLBACK_LANE_W
        n_pad = pl.cdiv(n, lane_w) * lane_w
        flat = jnp.pad(flat, (0, n_pad - n))
        padded = True

    rows = flat.size // lane_w
    x2d = flat.reshape(rows, lane_w)
    total_bytes = flat.size * itemsize

    # ~4 MiB tiles; row count is a sublane multiple, or the full row extent.
    block_rows = max(1, _TARGET_TILE_BYTES // (lane_w * itemsize))
    force_split = total_bytes > _SPLIT_BYTES and rows >= 2 * sublane
    if force_split:
        # Guarantee >= 2 grid steps so both v7x TensorCores stream HBM.
        block_rows = min(block_rows, rows // 2)
        block_rows = max(sublane, (block_rows // sublane) * sublane)
    elif block_rows >= rows:
        block_rows = rows  # single full-extent block (small arrays)
    else:
        block_rows = max(sublane, (block_rows // sublane) * sublane)

    grid = (pl.cdiv(rows, block_rows),)

    coef = jnp.stack(
        [jnp.asarray(p, jnp.float32).reshape(()) for p in (a, b, c, d)])

    out2d = pl.pallas_call(
        _poly3_kernel,
        out_shape=jax.ShapeDtypeStruct((rows, lane_w), orig_dtype),
        grid_spec=pltpu.PrefetchScalarGridSpec(
            num_scalar_prefetch=1,   # coef -> SMEM once, before the grid runs
            grid=grid,
            in_specs=[
                pl.BlockSpec((block_rows, lane_w), lambda i, coef: (i, 0)),
            ],
            out_specs=pl.BlockSpec((block_rows, lane_w), lambda i, coef: (i, 0)),
        ),
        compiler_params=pltpu.CompilerParams(
            dimension_semantics=("parallel",),
            # 4x tile (double-buffered in+out) ~ 16 MiB; 48 MiB is safe on all
            # generations including v7x's 64 MiB physical VMEM per TC.
            vmem_limit_bytes=48 * 1024 * 1024,
        ),
        cost_estimate=pl.CostEstimate(
            flops=6 * n,
            transcendentals=0,
            bytes_accessed=2 * n * itemsize + 16,
        ),
    )(coef, x2d)

    out = out2d.reshape(-1)
    if padded:
        out = out[:n]
    return out.reshape(orig_shape)


if __name__ == "__main__":
    key = jax.random.PRNGKey(0)
    kx, ka, kb, kc, kd = jax.random.split(key, 5)

    # Deterministic "randn"-style scalar parameters (shape (1,) like nn.Parameter)
    a = jax.random.normal(ka, (1,), dtype=jnp.float32)[0]
    b = jax.random.normal(kb, (1,), dtype=jnp.float32)[0]
    c = jax.random.normal(kc, (1,), dtype=jnp.float32)[0]
    d = jax.random.normal(kd, (1,), dtype=jnp.float32)[0]

    # Small NCHW-style input consistent with a generic forward(x)
    x = jax.random.normal(kx, (2, 4, 16, 16), dtype=jnp.float32)

    y = polynomial3(x, a, b, c, d)
    y = jax.block_until_ready(y)

    # Reference check in plain JAX
    y_ref = a * x + b * x**2 + c * x**3 + d
    assert y.shape == x.shape and y.dtype == x.dtype
    assert jnp.allclose(y, y_ref, atol=1e-5, rtol=1e-5)

    print("KERNEL_OK")
</pallas_src>

<mosaic_0001>
module attributes {stable_mosaic.version = 11 : i64} {
  func.func @_poly3_kernel(%arg0: i32, %arg1: memref<4xf32, #tpu.memory_space<smem>>, %arg2: memref<1x2048xf32, #tpu.memory_space<vmem>>, %arg3: memref<1x2048xf32, #tpu.memory_space<vmem>>) attributes {dimension_semantics = [#tpu.dimension_semantics<parallel>], iteration_bounds = array<i64: 1>, scalar_prefetch = 1 : i64, scratch_operands = 0 : i64, tpu.core_type = #tpu.core_type<tc>, window_params = [{transform_indices = @transform_0, window_bounds = array<i64: 1, 2048>}, {transform_indices = @transform_1, window_bounds = array<i64: 1, 2048>}]} {
    %c0 = arith.constant 0 : index
    %0 = memref.load %arg1[%c0] : memref<4xf32, #tpu.memory_space<smem>>
    %c1 = arith.constant 1 : index
    %1 = memref.load %arg1[%c1] : memref<4xf32, #tpu.memory_space<smem>>
    %c2 = arith.constant 2 : index
    %2 = memref.load %arg1[%c2] : memref<4xf32, #tpu.memory_space<smem>>
    %c3 = arith.constant 3 : index
    %3 = memref.load %arg1[%c3] : memref<4xf32, #tpu.memory_space<smem>>
    %c0_0 = arith.constant 0 : index
    %c0_1 = arith.constant 0 : index
    %4 = vector.load %arg2[%c0_0, %c0_1] : memref<1x2048xf32, #tpu.memory_space<vmem>>, vector<1x2048xf32>
    %5 = vector.broadcast %2 : f32 to vector<1x2048xf32>
    %6 = arith.mulf %4, %5 : vector<1x2048xf32>
    %7 = vector.broadcast %1 : f32 to vector<1x2048xf32>
    %8 = arith.addf %7, %6 : vector<1x2048xf32>
    %9 = arith.mulf %4, %8 : vector<1x2048xf32>
    %10 = vector.broadcast %0 : f32 to vector<1x2048xf32>
    %11 = arith.addf %10, %9 : vector<1x2048xf32>
    %12 = arith.mulf %4, %11 : vector<1x2048xf32>
    %13 = vector.broadcast %3 : f32 to vector<1x2048xf32>
    %14 = arith.addf %13, %12 : vector<1x2048xf32>
    %c0_2 = arith.constant 0 : index
    %c0_3 = arith.constant 0 : index
    %15 = vector.load %arg3[%c0_2, %c0_3] : memref<1x2048xf32, #tpu.memory_space<vmem>>, vector<1x2048xf32>
    tpu.vector_store %arg3[%c0_2, %c0_3], %14 {strides = array<i32>} : memref<1x2048xf32, #tpu.memory_space<vmem>>, vector<1x2048xf32>,
    return
  }
  func.func @transform_0(%arg0: i32, %arg1: memref<4xf32, #tpu.memory_space<smem>>) -> (i32, i32) {
    %c0_i32 = arith.constant 0 : i32
    %c0_i32_0 = arith.constant 0 : i32
    return %arg0, %c0_i32 : i32, i32
  }
  func.func @transform_1(%arg0: i32, %arg1: memref<4xf32, #tpu.memory_space<smem>>) -> (i32, i32) {
    %c0_i32 = arith.constant 0 : i32
    %c0_i32_0 = arith.constant 0 : i32
    return %arg0, %c0_i32 : i32, i32
  }
}

</mosaic_0001>

<llo_original>
// kernel: tpu_custom_call.1
$region0: #{tpu_custom_call.1}
  #allocation0 [shape = 'u32[]', space=smem, size = 0x4, offset = 0x4, fixed_abs, tag = 'smem constant byte address 0x4 - core index']
  #allocation1 [shape = 'u32[144,128]{1,0:T(1,128)}', space=vmem, size = 0x12000, scoped, tag = 'internal scratch']
  #allocation2 [shape = 's32[1]{0}', space=sflag, size = 0x4, scoped, tag = 'scoped memory for tpu_custom_call.1']
  #allocation3 [shape = 'u8[512]{0}', space=smem, size = 0x200, scoped, tag = 'prefetched SMEM operand 0']
  %s0 = inlined_call_operand.hbm [shape: f32[4], index: 0, kind: input, shape index: {}]
  %s1 = inlined_call_operand.hbm [shape: f32[1,2048], index: 1, kind: input, shape index: {}]
  %s2 = inlined_call_operand.hbm [shape: f32[1,2048], index: 2, kind: output, shape index: {}]
  %s3 = sld [smem:[#allocation0]]
  $region18: #{tpu_custom_call.1} parent=0
    _
  %s5 = ssub.s32 1, %s3
  %s6 = scalar_select 0, %s5, %s3
  %8 = dma.hbm_to_smem %s0, 16, [#allocation3], [#allocation2]
  %9 = dma.done [#allocation2], 16
  %10 = sfence
  $region1: #{tpu_custom_call.1} parent=0
    #allocation4 [shape = 'u8[8192]{0}', space=vmem, size = 0x2000, scoped, tag = 'input window, operand 1, single buffered']
    #allocation5 [shape = 's32[1]{0}', space=sflag, size = 0x4, scoped, tag = 'scoped memory for tpu_custom_call.1']
    #allocation6 [shape = 's32[1]{0}', space=sflag, size = 0x4, scoped, tag = 'scoped memory for tpu_custom_call.1']
    #allocation7 [shape = 'u8[8192]{0}', space=vmem, size = 0x2000, scoped, tag = 'output window, operand 0, single buffered']
    %11 = vsyncpa [#allocation5], 0
    %12 = vsyncpa [#allocation6], 0
    // Predicated region
    $region2: #{tpu_custom_call.1} parent=1 // pred_check
      _
    $region3: #{tpu_custom_call.1} parent=1 // pred_check_branch
      %14 = sbr.rel (0) target = $region5
    $region4: #{tpu_custom_call.1} parent=1 // pred_region
      %s16 = ssub.s32 256, 256
      %17 = vsyncadd [#allocation5], %s16
      %s19 = sshll.u32 [#allocation4], 4
      %s20 = int_to_ptr.vmem [resolvable:$true] %s19
      %22 = dma.hbm_to_vmem [thread:$0]  %s1, 256, %s20, [#allocation5]
    $region5: #{tpu_custom_call.1} parent=1 // pred_fallthru
      _
    // Predicated region
    $region6: #{tpu_custom_call.1} parent=1 // pred_check
      _
    $region7: #{tpu_custom_call.1} parent=1 // pred_check_branch
      %24 = sbr.rel (0) target = $region9
    $region8: #{tpu_custom_call.1} parent=1 // pred_region
      %25 = dma.done [#allocation5], 256
    $region9: #{tpu_custom_call.1} parent=1 // pred_fallthru
      _
    %s26 = sld [smem:[#allocation3]]
    %s27 = sld [smem:[#allocation3 + $0x1]]
    %s28 = sld [smem:[#allocation3 + $0x2]]
    %s29 = sld [smem:[#allocation3 + $0x3]]
    %v30 = vld [vmem:[#allocation4] sm:$0xff]
    %v31 = vld [vmem:[#allocation4 + $0x8] sm:$0xff]
    %v32 = vstv %s28
    %v33 = vmul.f32 %v30, %v32
    %v34 = vmul.f32 %v31, %v32
    %v35 = vstv %s27
    %v36 = vadd.f32 %v35, %v33
    %v37 = vadd.f32 %v35, %v34
    %v38 = vmul.f32 %v30, %v36
    %v39 = vmul.f32 %v31, %v37
    %v40 = vstv %s26
    %v41 = vadd.f32 %v40, %v38
    %v42 = vadd.f32 %v40, %v39
    %v43 = vmul.f32 %v30, %v41
    %v44 = vmul.f32 %v31, %v42
    %v45 = vstv %s29
    %v46 = vadd.f32 %v45, %v43
    %v47 = vadd.f32 %v45, %v44
    %48 = vst [vmem:[#allocation7] sm:$0xff] %v46
    %49 = vst [vmem:[#allocation7 + $0x8] sm:$0xff] %v47
    // Predicated region
    $region10: #{tpu_custom_call.1} parent=1 // pred_check
      _
    $region11: #{tpu_custom_call.1} parent=1 // pred_check_branch
      %51 = sbr.rel (0) target = $region13
    $region12: #{tpu_custom_call.1} parent=1 // pred_region
      %s53 = ssub.s32 256, 256
      %54 = vsyncadd [#allocation6], %s53
      %s56 = sshll.u32 [#allocation7], 4
      %s57 = int_to_ptr.vmem [resolvable:$true] %s56
      %59 = dma.vmem_to_hbm [thread:$0]  %s57, 256, %s2, [#allocation6]
    $region13: #{tpu_custom_call.1} parent=1 // pred_fallthru
      _
    // Predicated region
    $region14: #{tpu_custom_call.1} parent=1 // pred_check
      _
    $region15: #{tpu_custom_call.1} parent=1 // pred_check_branch
      %61 = sbr.rel (0) target = $region17
    $region16: #{tpu_custom_call.1} parent=1 // pred_region
      %62 = dma.done [#allocation6], 256
    $region17: #{tpu_custom_call.1} parent=1 // pred_fallthru
      _
    %63 = vsyncpa [#allocation5], 1
    %64 = vsyncpa [#allocation6], 1

</llo_original>
